<compile_context>
chip_gen: v7x
topology: tpu7x:2x2x1
jax: 0.10.0
libtpu: 0.0.40
codegen_flags: <defaults>
</compile_context>

<pallas_src>
import jax
import jax.numpy as jnp
from jax.experimental import pallas as pl
from jax.experimental.pallas import tpu as pltpu


def _round_up(x, m):
    return ((x + m - 1) // m) * m


def aux_predictor_kernel(h_ref, twt_ref, mask_ref, wc_ref, out_ref):
    # h_ref    : (TB, H)     f32   hidden_feature tile
    # twt_ref  : (TB, E, L)  bf16  target_word_feature, transposed so L = lanes
    # mask_ref : (TB, L)     i32   nonzero => masked
    # wc_ref   : (H, E)      f32   W_h^T @ W_tw  (combined projection weight)
    # out_ref  : (TB, L)     f32   softmax over L
    h = h_ref[...]
    wc = wc_ref[...]

    # Combined projection on the MXU: v = h @ (W_h^T @ W_tw)  -> (TB, E).
    v = jnp.dot(h, wc, preferred_element_type=jnp.float32)

    # logits[b, l] = sum_e v[b, e] * tw[b, e, l]
    # VPU broadcast-multiply (v broadcast along lanes) + sublane reduce over E.
    tw = twt_ref[...].astype(jnp.float32)                   # (TB, E, L)
    logits = jnp.sum(tw * v[:, :, None], axis=1)            # (TB, L)

    # In-kernel mask: large finite negative (avoids inf-inf NaN for rows that
    # are fully masked / batch-padded).
    logits = jnp.where(mask_ref[...] != 0, jnp.float32(-1e30), logits)

    # Softmax over L (lane reduce on a small (TB, L) tile).
    m = jnp.max(logits, axis=-1, keepdims=True)
    e = jnp.exp(logits - m)
    s = jnp.sum(e, axis=-1, keepdims=True)
    out_ref[...] = (e * pl.reciprocal(s, approx=True)).astype(out_ref.dtype)


def aux_predictor(hidden_feature, target_word_feature, mask, w_h, w_tw):
    B, H = hidden_feature.shape
    _, L, E = target_word_feature.shape
    assert mask.shape == (B, L)
    assert w_h.shape == (H, H)
    assert w_tw.shape == (H, E)

    # ---- batch-tile selection ----------------------------------------------
    # Cap the (double-buffered) bf16 tw block at ~2 MiB per buffer so the f32
    # temps of the multiply-reduce plus pipelining fit well under 32 MiB VMEM
    # on every generation (incl. v7x's 64 MiB part).
    tw_row_bytes = E * L * 2                                   # bf16 per batch row
    tb_cap = max(8, ((2 * 1024 * 1024) // tw_row_bytes) // 8 * 8)
    if B <= 8:
        TB = 8
    else:
        # >= 2 grid steps so ("parallel",) actually uses both v7x TensorCores;
        # up to 256 rows to amortize per-step overhead and fill the MXU M dim.
        TB = min(256, _round_up((B + 1) // 2, 8))
    TB = min(TB, tb_cap)
    B_pad = _round_up(B, TB)
    pad_b = B_pad - B

    # ---- wrapper-side prep (no fully padded copies of tw) -------------------
    # Combined weight (tiny H x E), computed once per call.
    w_comb = (w_h.astype(jnp.float32).T @ w_tw.astype(jnp.float32))   # (H, E)

    h_p = jnp.pad(hidden_feature.astype(jnp.float32), ((0, pad_b), (0, 0)))
    # Lane-dense layout: (B, E, L) with L on lanes; bf16 halves HBM bytes of
    # the dominant operand.
    tw_t = jnp.swapaxes(target_word_feature.astype(jnp.bfloat16), 1, 2)  # (B, E, L)
    tw_p = jnp.pad(tw_t, ((0, pad_b), (0, 0), (0, 0)))
    mask_p = jnp.pad(mask.astype(jnp.int32), ((0, pad_b), (0, 0)))

    out_pad = pl.pallas_call(
        aux_predictor_kernel,
        out_shape=jax.ShapeDtypeStruct((B_pad, L), jnp.float32),
        grid=(B_pad // TB,),
        in_specs=[
            pl.BlockSpec((TB, H), lambda i: (i, 0)),
            pl.BlockSpec((TB, E, L), lambda i: (i, 0, 0)),
            pl.BlockSpec((TB, L), lambda i: (i, 0)),
            pl.BlockSpec((H, E), lambda i: (0, 0)),   # resident across steps
        ],
        out_specs=pl.BlockSpec((TB, L), lambda i: (i, 0)),
        compiler_params=pltpu.CompilerParams(
            dimension_semantics=("parallel",),
            vmem_limit_bytes=32 * 1024 * 1024),
    )(h_p, tw_p, mask_p, w_comb)

    return out_pad[:B]


def aux_predictor_ref(hidden_feature, target_word_feature, mask, w_h, w_tw):
    """Pure-JAX reference mirroring the PyTorch forward."""
    h_proj = hidden_feature @ w_h.T                                   # (B, H)
    tw_proj = jnp.einsum("ble,he->blh", target_word_feature, w_tw)    # (B, L, H)
    logits = jnp.einsum("blh,bh->bl", tw_proj, h_proj)                # (B, L)
    logits = jnp.where(mask.astype(bool), -jnp.inf, logits)
    return jax.nn.softmax(logits, axis=-1)


def _run_case(key, B, L, E, H, atol):
    k_h, k_tw, k_wh, k_wtw, k_m = jax.random.split(key, 5)
    hidden_feature = jax.random.normal(k_h, (B, H), dtype=jnp.float32)
    target_word_feature = jax.random.normal(k_tw, (B, L, E), dtype=jnp.float32)
    w_h = jax.random.normal(k_wh, (H, H), dtype=jnp.float32) * 0.1
    w_tw = jax.random.normal(k_wtw, (H, E), dtype=jnp.float32) * 0.1
    # Keep at least one unmasked position per row (same requirement as the
    # PyTorch code: fully-masked rows would be NaN there).
    mask = (jax.random.uniform(k_m, (B, L)) > 0.5).astype(jnp.int32)
    mask = mask.at[:, 0].set(0)

    out = jax.block_until_ready(
        aux_predictor(hidden_feature, target_word_feature, mask, w_h, w_tw))
    ref = aux_predictor_ref(hidden_feature, target_word_feature, mask, w_h, w_tw)
    assert out.shape == (B, L)
    # Tolerance accounts for bf16 storage of tw, the reassociated contraction,
    # and the approx (EUP) reciprocal in the softmax normalizer.
    assert jnp.allclose(out, ref, atol=atol, rtol=atol), (out, ref)


if __name__ == "__main__":
    # Small shapes consistent with the module: batch=2, seq=8,
    # embedding_size=32, hidden_size=32.
    _run_case(jax.random.PRNGKey(0), B=2, L=8, E=32, H=32, atol=2e-2)
    # Multi-tile, lane-dense case (grid has 2 parallel steps, L = 128 lanes).
    _run_case(jax.random.PRNGKey(1), B=32, L=128, E=32, H=32, atol=2e-2)
    print("KERNEL_OK")
</pallas_src>

<mosaic_0001>
module attributes {stable_mosaic.version = 11 : i64} {
  func.func @aux_predictor_kernel(%arg0: i32, %arg1: memref<8x32xf32, #tpu.memory_space<vmem>>, %arg2: memref<8x32x8xbf16, #tpu.memory_space<vmem>>, %arg3: memref<8x8xi32, #tpu.memory_space<vmem>>, %arg4: memref<32x32xf32, #tpu.memory_space<vmem>>, %arg5: memref<8x8xf32, #tpu.memory_space<vmem>>) attributes {dimension_semantics = [#tpu.dimension_semantics<parallel>], iteration_bounds = array<i64: 1>, scalar_prefetch = 0 : i64, scratch_operands = 0 : i64, tpu.core_type = #tpu.core_type<tc>, window_params = [{transform_indices = @transform_0, window_bounds = array<i64: 8, 32>}, {transform_indices = @transform_1, window_bounds = array<i64: 8, 32, 8>}, {transform_indices = @transform_2, window_bounds = array<i64: 8, 8>}, {pipeline_mode = #tpu.pipeline_mode<synchronous>, transform_indices = @transform_3, window_bounds = array<i64: 32, 32>}, {transform_indices = @transform_4, window_bounds = array<i64: 8, 8>}]} {
    %c0 = arith.constant 0 : index
    %c0_0 = arith.constant 0 : index
    %0 = vector.load %arg1[%c0, %c0_0] : memref<8x32xf32, #tpu.memory_space<vmem>>, vector<8x32xf32>
    %c0_1 = arith.constant 0 : index
    %c0_2 = arith.constant 0 : index
    %1 = vector.load %arg4[%c0_1, %c0_2] : memref<32x32xf32, #tpu.memory_space<vmem>>, vector<32x32xf32>
    %cst = arith.constant dense<0.000000e+00> : vector<8x32xf32>
    %2 = tpu.matmul %0, %1, %cst {dimension_numbers = #tpu.dot_dimension_numbers<[1], [0], [0], [1], [0, 0, 1, 1], [], []>} : vector<8x32xf32>, vector<32x32xf32>, vector<8x32xf32> -> vector<8x32xf32>
    %c0_3 = arith.constant 0 : index
    %c0_4 = arith.constant 0 : index
    %c0_5 = arith.constant 0 : index
    %3 = vector.load %arg2[%c0_3, %c0_4, %c0_5] : memref<8x32x8xbf16, #tpu.memory_space<vmem>>, vector<8x32x8xbf16>
    %4 = arith.extf %3 : vector<8x32x8xbf16> to vector<8x32x8xf32>
    %5 = vector.shape_cast %2 : vector<8x32xf32> to vector<8x32x1xf32>
    %6 = vector.broadcast %5 : vector<8x32x1xf32> to vector<8x32x8xf32>
    %7 = arith.mulf %4, %6 : vector<8x32x8xf32>
    %cst_6 = arith.constant dense<0.000000e+00> : vector<8x8xf32>
    %8 = vector.multi_reduction <add>, %7, %cst_6 [1] : vector<8x32x8xf32> to vector<8x8xf32>
    %c0_7 = arith.constant 0 : index
    %c0_8 = arith.constant 0 : index
    %9 = vector.load %arg3[%c0_7, %c0_8] : memref<8x8xi32, #tpu.memory_space<vmem>>, vector<8x8xi32>
    %c0_i32 = arith.constant 0 : i32
    %10 = vector.broadcast %c0_i32 : i32 to vector<8x8xi32>
    %11 = arith.cmpi ne, %9, %10 : vector<8x8xi32>
    %cst_9 = arith.constant -1.000000e+30 : f32
    %12 = vector.broadcast %cst_9 : f32 to vector<8x8xf32>
    %13 = arith.select %11, %12, %8 : vector<8x8xi1>, vector<8x8xf32>
    %cst_10 = arith.constant dense<0xFF800000> : vector<8xf32>
    %14 = vector.multi_reduction <maximumf>, %13, %cst_10 [1] : vector<8x8xf32> to vector<8xf32>
    %15 = vector.shape_cast %14 : vector<8xf32> to vector<8x1xf32>
    %16 = vector.broadcast %15 : vector<8x1xf32> to vector<8x8xf32>
    %17 = arith.subf %13, %16 : vector<8x8xf32>
    %18 = math.exp %17 : vector<8x8xf32>
    %cst_11 = arith.constant dense<0.000000e+00> : vector<8xf32>
    %19 = vector.multi_reduction <add>, %18, %cst_11 [1] : vector<8x8xf32> to vector<8xf32>
    %20 = vector.shape_cast %19 : vector<8xf32> to vector<8x1xf32>
    %21 = tpu.reciprocal %20 {approx = true} : vector<8x1xf32> -> vector<8x1xf32>
    %22 = vector.broadcast %21 : vector<8x1xf32> to vector<8x8xf32>
    %23 = arith.mulf %18, %22 : vector<8x8xf32>
    %c0_12 = arith.constant 0 : index
    %c0_13 = arith.constant 0 : index
    %24 = vector.load %arg5[%c0_12, %c0_13] : memref<8x8xf32, #tpu.memory_space<vmem>>, vector<8x8xf32>
    tpu.vector_store %arg5[%c0_12, %c0_13], %23 {strides = array<i32>} : memref<8x8xf32, #tpu.memory_space<vmem>>, vector<8x8xf32>,
    return
  }
  func.func @transform_0(%arg0: i32) -> (i32, i32) {
    %c0_i32 = arith.constant 0 : i32
    %c0_i32_0 = arith.constant 0 : i32
    return %arg0, %c0_i32 : i32, i32
  }
  func.func @transform_1(%arg0: i32) -> (i32, i32, i32) {
    %c0_i32 = arith.constant 0 : i32
    %c0_i32_0 = arith.constant 0 : i32
    %c0_i32_1 = arith.constant 0 : i32
    return %arg0, %c0_i32, %c0_i32_0 : i32, i32, i32
  }
  func.func @transform_2(%arg0: i32) -> (i32, i32) {
    %c0_i32 = arith.constant 0 : i32
    %c0_i32_0 = arith.constant 0 : i32
    return %arg0, %c0_i32 : i32, i32
  }
  func.func @transform_3(%arg0: i32) -> (i32, i32) {
    %c0_i32 = arith.constant 0 : i32
    %c0_i32_0 = arith.constant 0 : i32
    %c0_i32_1 = arith.constant 0 : i32
    return %c0_i32, %c0_i32_0 : i32, i32
  }
  func.func @transform_4(%arg0: i32) -> (i32, i32) {
    %c0_i32 = arith.constant 0 : i32
    %c0_i32_0 = arith.constant 0 : i32
    return %arg0, %c0_i32 : i32, i32
  }
}

</mosaic_0001>

<llo_original>
// kernel: tpu_custom_call.1
$region0: #{tpu_custom_call.1}
  #allocation0 [shape = 'u32[]', space=smem, size = 0x4, offset = 0x4, fixed_abs, tag = 'smem constant byte address 0x4 - core index']
  #allocation1 [shape = 'u32[144,128]{1,0:T(1,128)}', space=vmem, size = 0x12000, scoped, tag = 'internal scratch']
  %s0 = inlined_call_operand.vmem [shape: f32[8,32], index: 0, kind: input, shape index: {}]
  %s1 = inlined_call_operand.vmem [shape: bf16[8,32,8], index: 1, kind: input, shape index: {}]
  %s2 = inlined_call_operand.vmem [shape: s32[8,8], index: 2, kind: input, shape index: {}]
  %s3 = inlined_call_operand.vmem [shape: f32[32,32], index: 3, kind: input, shape index: {}]
  %s4 = inlined_call_operand.hbm [shape: f32[8,8], index: 4, kind: output, shape index: {}]
  %s5 = sld [smem:[#allocation0]]
  $region26: #{tpu_custom_call.1} parent=0
    _
  %s7 = ssub.s32 1, %s5
  %s8 = scalar_select 0, %s7, %s5
  $region1: #{tpu_custom_call.1} parent=0
    #allocation2 [shape = 'u8[4096]{0}', space=vmem, size = 0x1000, scoped, tag = 'output window, operand 0, single buffered']
    #allocation3 [shape = 's32[1]{0}', space=sflag, size = 0x4, scoped, tag = 'scoped memory for tpu_custom_call.1']
    %9 = vsyncpa [#allocation3], 0
    // Predicated region
    $region2: #{tpu_custom_call.1} parent=1 // pred_check
      _
    $region3: #{tpu_custom_call.1} parent=1 // pred_check_branch
      %11 = sbr.rel (0) target = $region5
    $region4: #{tpu_custom_call.1} parent=1 // pred_region
      _
    $region5: #{tpu_custom_call.1} parent=1 // pred_fallthru
      _
    // Predicated region
    $region6: #{tpu_custom_call.1} parent=1 // pred_check
      _
    $region7: #{tpu_custom_call.1} parent=1 // pred_check_branch
      %13 = sbr.rel (0) target = $region9
    $region8: #{tpu_custom_call.1} parent=1 // pred_region
      _
    $region9: #{tpu_custom_call.1} parent=1 // pred_fallthru
      _
    // Predicated region
    $region10: #{tpu_custom_call.1} parent=1 // pred_check
      _
    $region11: #{tpu_custom_call.1} parent=1 // pred_check_branch
      %15 = sbr.rel (0) target = $region13
    $region12: #{tpu_custom_call.1} parent=1 // pred_region
      _
    $region13: #{tpu_custom_call.1} parent=1 // pred_fallthru
      _
    // Predicated region
    $region14: #{tpu_custom_call.1} parent=1 // pred_check
      _
    $region15: #{tpu_custom_call.1} parent=1 // pred_check_branch
      %17 = sbr.rel (0) target = $region17
    $region16: #{tpu_custom_call.1} parent=1 // pred_region
      _
    $region17: #{tpu_custom_call.1} parent=1 // pred_fallthru
      _
    %v18 = vld [vmem:[%s0] sm:$0xff]
    %v19 = vld [vmem:[%s3] sm:$0xff]
    %v20 = vld [vmem:[%s3 + $0x8] sm:$0xff]
    %v21 = vld [vmem:[%s3 + $0x10] sm:$0xff]
    %v22 = vld [vmem:[%s3 + $0x18] sm:$0xff]
    %vm23 = vcmask 261120
    %v25 = vsel %vm23, %v18, 0
    %27 = vmatprep.subr.mxu0 0.0
    %28 = vmatpush1.msra.mxu0 %v19
    %29 = vmatprep.subr.mxu0 0.0
    %30 = vmatpush1.msra.mxu0 %v20
    %31 = vmatprep.subr.mxu0 0.0
    %32 = vmatpush1.msra.mxu0 %v21
    %33 = vmatprep.subr.mxu0 0.0
    %34 = vmatpush1.msra.mxu0 %v22
    %35 = vmatprep.subr.mxu0 0.0
    %36 = vmatpush1.msra.mxu0 0.0
    %37 = vmatprep.subr.mxu0 0.0
    %38 = vmatpush1.msra.mxu0 0.0
    %39 = vmatprep.subr.mxu0 0.0
    %40 = vmatpush1.msra.mxu0 0.0
    %41 = vmatprep.subr.mxu0 0.0
    %42 = vmatpush1.msra.mxu0 0.0
    %43 = vmatprep.subr.mxu0 0.0
    %44 = vmatpush1.msra.mxu0 0.0
    %45 = vmatprep.subr.mxu0 0.0
    %46 = vmatpush1.msra.mxu0 0.0
    %47 = vmatprep.subr.mxu0 0.0
    %48 = vmatpush1.msra.mxu0 0.0
    %49 = vmatprep.subr.mxu0 0.0
    %50 = vmatpush1.msra.mxu0 0.0
    %51 = vmatprep.subr.mxu0 0.0
    %52 = vmatpush1.msra.mxu0 0.0
    %53 = vmatprep.subr.mxu0 0.0
    %54 = vmatpush1.msra.mxu0 0.0
    %55 = vmatprep.subr.mxu0 0.0
    %56 = vmatpush1.msra.mxu0 0.0
    %57 = vmatprep.subr.mxu0 0.0
    %58 = vmatpush1.msra.mxu0 0.0
    %59 = vmatprep.subr.mxu0 0.0
    %60 = vmatpush1.msra.mxu0 0.0
    %61 = vmatprep.subr.mxu0 0.0
    %62 = vmatpush1.msra.mxu0 0.0
    %63 = vmatprep.subr.mxu0 0.0
    %64 = vmatpush1.msra.mxu0 0.0
    %65 = vmatprep.subr.mxu0 0.0
    %66 = vmatpush1.msra.mxu0 0.0
    %67 = vmatprep.subr.mxu0 0.0
    %68 = vmatpush1.msra.mxu0 0.0
    %69 = vmatprep.subr.mxu0 0.0
    %70 = vmatpush1.msra.mxu0 0.0
    %71 = vmatprep.subr.mxu0 0.0
    %72 = vmatpush1.msra.mxu0 0.0
    %73 = vmatprep.subr.mxu0 0.0
    %74 = vmatpush1.msra.mxu0 0.0
    %75 = vmatprep.subr.mxu0 0.0
    %76 = vmatpush1.msra.mxu0 0.0
    %77 = vmatprep.subr.mxu0 0.0
    %78 = vmatpush1.msra.mxu0 0.0
    %79 = vmatprep.subr.mxu0 0.0
    %80 = vmatpush1.msra.mxu0 0.0
    %81 = vmatprep.subr.mxu0 0.0
    %82 = vmatpush1.msra.mxu0 0.0
    %83 = vmatprep.subr.mxu0 0.0
    %84 = vmatpush1.msra.mxu0 0.0
    %85 = vmatprep.subr.mxu0 0.0
    %86 = vmatpush1.msra.mxu0 0.0
    %87 = vmatprep.subr.mxu0 0.0
    %88 = vmatpush1.msra.mxu0 0.0
    %89 = vmatprep.subr.mxu0 0.0
    %90 = vmatpush1.msra.mxu0 0.0
    %91 = vmatprep.mubr.f32.mxu0 0.0
    %92 = vmatmul.mubr.f32.gmra.mrb[0].mxu0 %v25
    %v93 = vpop.f32.mrb[0].mxu0
    %v94 = vadd.f32 0.0, %v93
    %v95 = vpop.f32.mrb[0].mxu0
    %96 = vdwg.mxu0
    %v97 = vld [vmem:[%s1] sm:$0xf]
    %v98 = vld [vmem:[%s1 + $0x4] sm:$0xf]
    %v99 = vld [vmem:[%s1 + $0x8] sm:$0xf]
    %v100 = vld [vmem:[%s1 + $0xc] sm:$0xf]
    %v101 = vld [vmem:[%s1 + $0x10] sm:$0xf]
    %v102 = vld [vmem:[%s1 + $0x14] sm:$0xf]
    %v103 = vld [vmem:[%s1 + $0x18] sm:$0xf]
    %v104 = vld [vmem:[%s1 + $0x1c] sm:$0xf]
    %v105 = vld [vmem:[%s1 + $0x20] sm:$0xf]
    %v106 = vld [vmem:[%s1 + $0x24] sm:$0xf]
    %v107 = vld [vmem:[%s1 + $0x28] sm:$0xf]
    %v108 = vld [vmem:[%s1 + $0x2c] sm:$0xf]
    %v109 = vld [vmem:[%s1 + $0x30] sm:$0xf]
    %v110 = vld [vmem:[%s1 + $0x34] sm:$0xf]
    %v111 = vld [vmem:[%s1 + $0x38] sm:$0xf]
    %v112 = vld [vmem:[%s1 + $0x3c] sm:$0xf]
    %v113 = vld [vmem:[%s1 + $0x40] sm:$0xf]
    %v114 = vld [vmem:[%s1 + $0x44] sm:$0xf]
    %v115 = vld [vmem:[%s1 + $0x48] sm:$0xf]
    %v116 = vld [vmem:[%s1 + $0x4c] sm:$0xf]
    %v117 = vld [vmem:[%s1 + $0x50] sm:$0xf]
    %v118 = vld [vmem:[%s1 + $0x54] sm:$0xf]
    %v119 = vld [vmem:[%s1 + $0x58] sm:$0xf]
    %v120 = vld [vmem:[%s1 + $0x5c] sm:$0xf]
    %v121 = vld [vmem:[%s1 + $0x60] sm:$0xf]
    %v122 = vld [vmem:[%s1 + $0x64] sm:$0xf]
    %v123 = vld [vmem:[%s1 + $0x68] sm:$0xf]
    %v124 = vld [vmem:[%s1 + $0x6c] sm:$0xf]
    %v125 = vld [vmem:[%s1 + $0x70] sm:$0xf]
    %v126 = vld [vmem:[%s1 + $0x74] sm:$0xf]
    %v127 = vld [vmem:[%s1 + $0x78] sm:$0xf]
    %v128 = vld [vmem:[%s1 + $0x7c] sm:$0xf]
    %v129 = vunpack.c.l.bf16 %v97
    %v130 = vunpack.c.l.bf16 %v98
    %v131 = vunpack.c.l.bf16 %v99
    %v132 = vunpack.c.l.bf16 %v100
    %v133 = vunpack.c.l.bf16 %v101
    %v134 = vunpack.c.l.bf16 %v102
    %v135 = vunpack.c.l.bf16 %v103
    %v136 = vunpack.c.l.bf16 %v104
    %v137 = vunpack.c.l.bf16 %v105
    %v138 = vunpack.c.l.bf16 %v106
    %v139 = vunpack.c.l.bf16 %v107
    %v140 = vunpack.c.l.bf16 %v108
    %v141 = vunpack.c.l.bf16 %v109
    %v142 = vunpack.c.l.bf16 %v110
    %v143 = vunpack.c.l.bf16 %v111
    %v144 = vunpack.c.l.bf16 %v112
    %v145 = vunpack.c.l.bf16 %v113
    %v146 = vunpack.c.l.bf16 %v114
    %v147 = vunpack.c.l.bf16 %v115
    %v148 = vunpack.c.l.bf16 %v116
    %v149 = vunpack.c.l.bf16 %v117
    %v150 = vunpack.c.l.bf16 %v118
    %v151 = vunpack.c.l.bf16 %v119
    %v152 = vunpack.c.l.bf16 %v120
    %v153 = vunpack.c.l.bf16 %v121
    %v154 = vunpack.c.l.bf16 %v122
    %v155 = vunpack.c.l.bf16 %v123
    %v156 = vunpack.c.l.bf16 %v124
    %v157 = vunpack.c.l.bf16 %v125
    %v158 = vunpack.c.l.bf16 %v126
    %v159 = vunpack.c.l.bf16 %v127
    %v160 = vunpack.c.l.bf16 %v128
    %v161 = vlaneseq
    %v162 = vshrl.u32 %v161, 7
    %v163 = vsub.s32 0, %v162
    %v164 = vrot.slane %v94, %v163
    %166 = vbcast.lane.b32.xlu0 %v164, 256
    %v167 = vpop.permute.xlu0 %166
    %s169 = sor.u32 256, 8
    %170 = vbcast.lane.b32.xlu0 %v164, %s169
    %v171 = vpop.permute.xlu0 %170
    %s173 = sor.u32 256, 16
    %174 = vbcast.lane.b32.xlu0 %v164, %s173
    %v175 = vpop.permute.xlu0 %174
    %s177 = sor.u32 256, 24
    %178 = vbcast.lane.b32.xlu0 %v164, %s177
    %v179 = vpop.permute.xlu0 %178
    %v180 = vlaneseq
    %v181 = vshrl.u32 %v180, 7
    %v182 = vsub.s32 1, %v181
    %v183 = vrot.slane %v94, %v182
    %185 = vbcast.lane.b32.xlu0 %v183, 256
    %v186 = vpop.permute.xlu0 %185
    %s188 = sor.u32 256, 8
    %189 = vbcast.lane.b32.xlu0 %v183, %s188
    %v190 = vpop.permute.xlu0 %189
    %s192 = sor.u32 256, 16
    %193 = vbcast.lane.b32.xlu0 %v183, %s192
    %v194 = vpop.permute.xlu0 %193
    %s196 = sor.u32 256, 24
    %197 = vbcast.lane.b32.xlu0 %v183, %s196
    %v198 = vpop.permute.xlu0 %197
    %v199 = vlaneseq
    %v200 = vshrl.u32 %v199, 7
    %v201 = vsub.s32 2, %v200
    %v202 = vrot.slane %v94, %v201
    %204 = vbcast.lane.b32.xlu0 %v202, 256
    %v205 = vpop.permute.xlu0 %204
    %s207 = sor.u32 256, 8
    %208 = vbcast.lane.b32.xlu0 %v202, %s207
    %v209 = vpop.permute.xlu0 %208
    %s211 = sor.u32 256, 16
    %212 = vbcast.lane.b32.xlu0 %v202, %s211
    %v213 = vpop.permute.xlu0 %212
    %s215 = sor.u32 256, 24
    %216 = vbcast.lane.b32.xlu0 %v202, %s215
    %v217 = vpop.permute.xlu0 %216
    %v218 = vlaneseq
    %v219 = vshrl.u32 %v218, 7
    %v220 = vsub.s32 3, %v219
    %v221 = vrot.slane %v94, %v220
    %223 = vbcast.lane.b32.xlu0 %v221, 256
    %v224 = vpop.permute.xlu0 %223
    %s226 = sor.u32 256, 8
    %227 = vbcast.lane.b32.xlu0 %v221, %s226
    %v228 = vpop.permute.xlu0 %227
    %s230 = sor.u32 256, 16
    %231 = vbcast.lane.b32.xlu0 %v221, %s230
    %v232 = vpop.permute.xlu0 %231
    %s234 = sor.u32 256, 24
    %235 = vbcast.lane.b32.xlu0 %v221, %s234
    %v236 = vpop.permute.xlu0 %235
    %v237 = vlaneseq
    %v238 = vshrl.u32 %v237, 7
    %v239 = vsub.s32 4, %v238
    %v240 = vrot.slane %v94, %v239
    %242 = vbcast.lane.b32.xlu0 %v240, 256
    %v243 = vpop.permute.xlu0 %242
    %s245 = sor.u32 256, 8
    %246 = vbcast.lane.b32.xlu0 %v240, %s245
    %v247 = vpop.permute.xlu0 %246
    %s249 = sor.u32 256, 16
    %250 = vbcast.lane.b32.xlu0 %v240, %s249
    %v251 = vpop.permute.xlu0 %250
    %s253 = sor.u32 256, 24
    %254 = vbcast.lane.b32.xlu0 %v240, %s253
    %v255 = vpop.permute.xlu0 %254
    %v256 = vlaneseq
    %v257 = vshrl.u32 %v256, 7
    %v258 = vsub.s32 5, %v257
    %v259 = vrot.slane %v94, %v258
    %261 = vbcast.lane.b32.xlu0 %v259, 256
    %v262 = vpop.permute.xlu0 %261
    %s264 = sor.u32 256, 8
    %265 = vbcast.lane.b32.xlu0 %v259, %s264
    %v266 = vpop.permute.xlu0 %265
    %s268 = sor.u32 256, 16
    %269 = vbcast.lane.b32.xlu0 %v259, %s268
    %v270 = vpop.permute.xlu0 %269
    %s272 = sor.u32 256, 24
    %273 = vbcast.lane.b32.xlu0 %v259, %s272
    %v274 = vpop.permute.xlu0 %273
    %v275 = vlaneseq
    %v276 = vshrl.u32 %v275, 7
    %v277 = vsub.s32 6, %v276
    %v278 = vrot.slane %v94, %v277
    %280 = vbcast.lane.b32.xlu0 %v278, 256
    %v281 = vpop.permute.xlu0 %280
    %s283 = sor.u32 256, 8
    %284 = vbcast.lane.b32.xlu0 %v278, %s283
    %v285 = vpop.permute.xlu0 %284
    %s287 = sor.u32 256, 16
    %288 = vbcast.lane.b32.xlu0 %v278, %s287
    %v289 = vpop.permute.xlu0 %288
    %s291 = sor.u32 256, 24
    %292 = vbcast.lane.b32.xlu0 %v278, %s291
    %v293 = vpop.permute.xlu0 %292
    %v294 = vlaneseq
    %v295 = vshrl.u32 %v294, 7
    %v296 = vsub.s32 7, %v295
    %v297 = vrot.slane %v94, %v296
    %299 = vbcast.lane.b32.xlu0 %v297, 256
    %v300 = vpop.permute.xlu0 %299
    %s302 = sor.u32 256, 8
    %303 = vbcast.lane.b32.xlu0 %v297, %s302
    %v304 = vpop.permute.xlu0 %303
    %s306 = sor.u32 256, 16
    %307 = vbcast.lane.b32.xlu0 %v297, %s306
    %v308 = vpop.permute.xlu0 %307
    %s310 = sor.u32 256, 24
    %311 = vbcast.lane.b32.xlu0 %v297, %s310
    %v312 = vpop.permute.xlu0 %311
    %v313 = vmul.f32 %v129, %v167
    %v314 = vmul.f32 %v130, %v171
    %v315 = vmul.f32 %v131, %v175
    %v316 = vmul.f32 %v132, %v179
    %v317 = vmul.f32 %v133, %v186
    %v318 = vmul.f32 %v134, %v190
    %v319 = vmul.f32 %v135, %v194
    %v320 = vmul.f32 %v136, %v198
    %v321 = vmul.f32 %v137, %v205
    %v322 = vmul.f32 %v138, %v209
    %v323 = vmul.f32 %v139, %v213
    %v324 = vmul.f32 %v140, %v217
    %v325 = vmul.f32 %v141, %v224
    %v326 = vmul.f32 %v142, %v228
    %v327 = vmul.f32 %v143, %v232
    %v328 = vmul.f32 %v144, %v236
    %v329 = vmul.f32 %v145, %v243
    %v330 = vmul.f32 %v146, %v247
    %v331 = vmul.f32 %v147, %v251
    %v332 = vmul.f32 %v148, %v255
    %v333 = vmul.f32 %v149, %v262
    %v334 = vmul.f32 %v150, %v266
    %v335 = vmul.f32 %v151, %v270
    %v336 = vmul.f32 %v152, %v274
    %v337 = vmul.f32 %v153, %v281
    %v338 = vmul.f32 %v154, %v285
    %v339 = vmul.f32 %v155, %v289
    %v340 = vmul.f32 %v156, %v293
    %v341 = vmul.f32 %v157, %v300
    %v342 = vmul.f32 %v158, %v304
    %v343 = vmul.f32 %v159, %v308
    %v344 = vmul.f32 %v160, %v312
    %vm345 = vcmask 64512
    %v346 = vsel %vm345, %v313, 0.0
    %v347 = vsel %vm345, %v314, 0.0
    %v348 = vadd.f32 %v346, %v347
    %v349 = vsel %vm345, %v315, 0.0
    %v350 = vadd.f32 %v348, %v349
    %v351 = vsel %vm345, %v316, 0.0
    %v352 = vadd.f32 %v350, %v351
    %v353 = vrot.slane %v352, 4
    %v354 = vadd.f32 %v352, %v353
    %v355 = vrot.slane %v354, 2
    %v356 = vadd.f32 %v354, %v355
    %v357 = vrot.slane %v356, 1
    %v358 = vadd.f32 %v356, %v357
    %v359 = vsel %vm345, %v317, 0.0
    %v360 = vsel %vm345, %v318, 0.0
    %v361 = vadd.f32 %v359, %v360
    %v362 = vsel %vm345, %v319, 0.0
    %v363 = vadd.f32 %v361, %v362
    %v364 = vsel %vm345, %v320, 0.0
    %v365 = vadd.f32 %v363, %v364
    %v366 = vrot.slane %v365, 4
    %v367 = vadd.f32 %v365, %v366
    %v368 = vrot.slane %v367, 2
    %v369 = vadd.f32 %v367, %v368
    %v370 = vrot.slane %v369, 1
    %v371 = vadd.f32 %v369, %v370
    %v372 = vsel %vm345, %v321, 0.0
    %v373 = vsel %vm345, %v322, 0.0
    %v374 = vadd.f32 %v372, %v373
    %v375 = vsel %vm345, %v323, 0.0
    %v376 = vadd.f32 %v374, %v375
    %v377 = vsel %vm345, %v324, 0.0
    %v378 = vadd.f32 %v376, %v377
    %v379 = vrot.slane %v378, 4
    %v380 = vadd.f32 %v378, %v379
    %v381 = vrot.slane %v380, 2
    %v382 = vadd.f32 %v380, %v381
    %v383 = vrot.slane %v382, 1
    %v384 = vadd.f32 %v382, %v383
    %v385 = vsel %vm345, %v325, 0.0
    %v386 = vsel %vm345, %v326, 0.0
    %v387 = vadd.f32 %v385, %v386
    %v388 = vsel %vm345, %v327, 0.0
    %v389 = vadd.f32 %v387, %v388
    %v390 = vsel %vm345, %v328, 0.0
    %v391 = vadd.f32 %v389, %v390
    %v392 = vrot.slane %v391, 4
    %v393 = vadd.f32 %v391, %v392
    %v394 = vrot.slane %v393, 2
    %v395 = vadd.f32 %v393, %v394
    %v396 = vrot.slane %v395, 1
    %v397 = vadd.f32 %v395, %v396
    %v398 = vsel %vm345, %v329, 0.0
    %v399 = vsel %vm345, %v330, 0.0
    %v400 = vadd.f32 %v398, %v399
    %v401 = vsel %vm345, %v331, 0.0
    %v402 = vadd.f32 %v400, %v401
    %v403 = vsel %vm345, %v332, 0.0
    %v404 = vadd.f32 %v402, %v403
    %v405 = vrot.slane %v404, 4
    %v406 = vadd.f32 %v404, %v405
    %v407 = vrot.slane %v406, 2
    %v408 = vadd.f32 %v406, %v407
    %v409 = vrot.slane %v408, 1
    %v410 = vadd.f32 %v408, %v409
    %v411 = vsel %vm345, %v333, 0.0
    %v412 = vsel %vm345, %v334, 0.0
    %v413 = vadd.f32 %v411, %v412
    %v414 = vsel %vm345, %v335, 0.0
    %v415 = vadd.f32 %v413, %v414
    %v416 = vsel %vm345, %v336, 0.0
    %v417 = vadd.f32 %v415, %v416
    %v418 = vrot.slane %v417, 4
    %v419 = vadd.f32 %v417, %v418
    %v420 = vrot.slane %v419, 2
    %v421 = vadd.f32 %v419, %v420
    %v422 = vrot.slane %v421, 1
    %v423 = vadd.f32 %v421, %v422
    %v424 = vsel %vm345, %v337, 0.0
    %v425 = vsel %vm345, %v338, 0.0
    %v426 = vadd.f32 %v424, %v425
    %v427 = vsel %vm345, %v339, 0.0
    %v428 = vadd.f32 %v426, %v427
    %v429 = vsel %vm345, %v340, 0.0
    %v430 = vadd.f32 %v428, %v429
    %v431 = vrot.slane %v430, 4
    %v432 = vadd.f32 %v430, %v431
    %v433 = vrot.slane %v432, 2
    %v434 = vadd.f32 %v432, %v433
    %v435 = vrot.slane %v434, 1
    %v436 = vadd.f32 %v434, %v435
    %v437 = vsel %vm345, %v341, 0.0
    %v438 = vsel %vm345, %v342, 0.0
    %v439 = vadd.f32 %v437, %v438
    %v440 = vsel %vm345, %v343, 0.0
    %v441 = vadd.f32 %v439, %v440
    %v442 = vsel %vm345, %v344, 0.0
    %v443 = vadd.f32 %v441, %v442
    %v444 = vrot.slane %v443, 4
    %v445 = vadd.f32 %v443, %v444
    %v446 = vrot.slane %v445, 2
    %v447 = vadd.f32 %v445, %v446
    %v448 = vrot.slane %v447, 1
    %v449 = vadd.f32 %v447, %v448
    %v450 = vld [vmem:[%s2] sm:$0xff]
    %vm451 = vcmp.ne.s32.totalorder %v450, 0
    %vm460 = vcmask 1041409
    %v461 = vsel %vm460, %v371, %v358
    %vm462 = vcmask 1042434
    %v463 = vsel %vm462, %v384, %v461
    %vm464 = vcmask 1043459
    %v465 = vsel %vm464, %v397, %v463
    %vm466 = vcmask 1044484
    %v467 = vsel %vm466, %v410, %v465
    %vm468 = vcmask 1045509
    %v469 = vsel %vm468, %v423, %v467
    %vm470 = vcmask 1046534
    %v471 = vsel %vm470, %v436, %v469
    %vm472 = vcmask 1047559
    %v473 = vsel %vm472, %v449, %v471
    %v475 = vsel %vm451, -1e+30, %v473
    %v476 = vsel %vm345, %v475, -inf
    %477 = vmax.xlane.f32.xlu0 %v476
    %v478 = vpop.xlane.xlu0 %477
    %v479 = vsub.f32 %v475, %v478
    %v480 = vmul.f32 %v479, 1.442695
    %v481 = vpow.pop %v480
    %v482 = vsel %vm345, %v481, 0.0
    %483 = vadd.xlane.f32.xlu0 %v482
    %v484 = vpop.xlane.xlu0 %483
    %v485 = vrcp.pop %v484
    %v486 = vmul.f32 %v481, %v485
    %487 = vst.msk [vmem:[#allocation2] sm:$0xff] %vm345, %v486
    // Predicated region
    $region18: #{tpu_custom_call.1} parent=1 // pred_check
      _
    $region19: #{tpu_custom_call.1} parent=1 // pred_check_branch
      %489 = sbr.rel (0) target = $region21
    $region20: #{tpu_custom_call.1} parent=1 // pred_region
      %s491 = ssub.s32 128, 128
      %492 = vsyncadd [#allocation3], %s491
      %s494 = sshll.u32 [#allocation2], 4
      %s495 = int_to_ptr.vmem [resolvable:$true] %s494
      %497 = dma.vmem_to_hbm [thread:$0]  %s495, 128, %s4, [#allocation3]
    $region21: #{tpu_custom_call.1} parent=1 // pred_fallthru
      _
    // Predicated region
    $region22: #{tpu_custom_call.1} parent=1 // pred_check
      _
    $region23: #{tpu_custom_call.1} parent=1 // pred_check_branch
      %499 = sbr.rel (0) target = $region25
    $region24: #{tpu_custom_call.1} parent=1 // pred_region
      %500 = dma.done [#allocation3], 128
    $region25: #{tpu_custom_call.1} parent=1 // pred_fallthru
      _
    %501 = vsyncpa [#allocation3], 1

</llo_original>
